<compile_context>
chip_gen: v7x
topology: tpu7x:2x2x1
jax: 0.10.0
libtpu: 0.0.40
codegen_flags: <defaults>
</compile_context>

<pallas_src>
import functools

import jax
import jax.numpy as jnp
from jax.experimental import pallas as pl
from jax.experimental.pallas import tpu as pltpu

_LANE = 128


def _round_up(x: int, m: int) -> int:
    return ((x + m - 1) // m) * m


def _round_down(x: int, m: int) -> int:
    return (x // m) * m


def _sublane_multiple(dtype) -> int:
    # Sub-32-bit dtypes pack along sublanes: the minimum second-to-last block
    # dim grows (8 for f32/i32, 16 for bf16/f16, 32 for int8/fp8).
    itemsize = jnp.dtype(dtype).itemsize
    return {4: 8, 2: 16, 1: 32}.get(itemsize, 8)


def _lane_fold(x: jax.Array) -> jax.Array:
    """Fold 128-wide lane groups of (R, C) into a lane-dense (R, 128) partial sum.

    Pure VALU adds of lane-aligned static slices; keeps per-step work off the
    XLU so the single cross-lane reduce happens only once at finalize time.
    C must be a multiple of 128 (guaranteed by tile selection); the unroll is
    bounded by max_tile_hw // 128 (<= 64 adds).
    """
    _, c = x.shape
    n_tiles = c // _LANE
    partial = x[:, :_LANE]
    for t in range(1, n_tiles):
        partial = partial + x[:, t * _LANE:(t + 1) * _LANE]
    return partial


def _gap_single_kernel(x_ref, o_ref, *, hw_total):
    # Single HW tile per NC tile: one streaming pass, no accumulator scratch,
    # no pl.when, and a full-extent last block dim so there is nothing to mask.
    x = x_ref[...].astype(jnp.float32)
    s = jnp.sum(x, axis=1, keepdims=True)
    o_ref[...] = (s * (1.0 / float(hw_total))).astype(o_ref.dtype)


def _gap_reduce_kernel(x_ref, o_ref, acc_ref, *, hw_total, tile_hw, need_mask):
    # x_ref:  (tile_nc, tile_hw) input block in VMEM
    # o_ref:  (tile_nc, 1) output block (resident across the HW/reduction axis)
    # acc_ref:(tile_nc, 128) lane-dense f32 accumulator scratch
    k = pl.program_id(1)
    last = pl.num_programs(1) - 1

    @pl.when(k == 0)
    def _():
        acc_ref[...] = jnp.zeros_like(acc_ref)

    if need_mask:
        # Only the final HW block can overhang the array: keep the
        # iota/compare/where mask off the steady-state steps.
        @pl.when(k < last)
        def _():
            acc_ref[...] += _lane_fold(x_ref[...].astype(jnp.float32))

        @pl.when(k == last)
        def _():
            x = x_ref[...].astype(jnp.float32)
            col = jax.lax.broadcasted_iota(jnp.int32, x.shape, 1)
            valid = hw_total - k * tile_hw
            x = jnp.where(col < valid, x, 0.0)
            acc_ref[...] += _lane_fold(x)
    else:
        acc_ref[...] += _lane_fold(x_ref[...].astype(jnp.float32))

    @pl.when(k == last)
    def _():
        # Single cross-lane (XLU) reduce per NC tile, then 1/HW scale.
        s = jnp.sum(acc_ref[...], axis=1, keepdims=True)
        o_ref[...] = (s * (1.0 / float(hw_total))).astype(o_ref.dtype)


def global_avg_pool_2d(x: jax.Array, *, block_budget_bytes: int = 8 << 20,
                       max_tile_hw: int = 8192) -> jax.Array:
    """x: (N, C, H, W) -> (N, C, 1, 1), mean over spatial dims.

    block_budget_bytes (~8 MiB default) drives tile selection: double-buffered
    it stays well under the scoped-VMEM ceilings on v5e/v6e/v7x while keeping
    the per-grid-step fixed overhead (~0.35 us) negligible for this purely
    HBM-bandwidth-bound op.
    """
    n, c, h, w = x.shape
    nc, hw = n * c, h * w
    x2 = x.reshape(nc, hw)

    dtype = x.dtype
    itemsize = jnp.dtype(dtype).itemsize
    sublane = _sublane_multiple(dtype)

    hw_padded = _round_up(hw, _LANE)
    budget_elems = max(block_budget_bytes // itemsize, sublane * _LANE)

    # HW tile: lane-aligned, capped by the byte budget (at minimal NC) and by
    # max_tile_hw (bounds the unrolled lane fold in the reduce kernel).
    hw_cap = min(max_tile_hw, max(_LANE, _round_down(budget_elems // sublane, _LANE)))
    hw_cap = max(_LANE, _round_down(hw_cap, _LANE))

    single_pass = hw_padded <= hw_cap
    if single_pass:
        block_hw = hw               # full dim: no padded columns, no mask
        hw_tiles = 1
        hw_footprint = hw_padded    # VMEM footprint is lane-padded anyway
    else:
        block_hw = hw_cap
        hw_tiles = pl.cdiv(hw, block_hw)
        hw_footprint = block_hw
    need_mask = (not single_pass) and (hw % block_hw != 0)

    # NC tile: fill the remaining byte budget (this is where tiny spatial maps
    # like 7x7 grow the NC tile far past 256).
    nc_cap = max(sublane, _round_down(budget_elems // hw_footprint, sublane))
    tile_nc = nc if nc <= nc_cap else nc_cap

    total_bytes = nc * hw * itemsize
    # v7x megacore: ensure the "parallel" NC axis has >= 2 grid tiles when
    # there is enough work to be worth sharding across both TensorCores.
    if tile_nc >= nc and nc >= 2 * sublane and total_bytes >= (4 << 20):
        tile_nc = _round_up((nc + 1) // 2, sublane)

    nc_tiles = pl.cdiv(nc, tile_nc)

    # Scoped-VMEM limit sized from the actual tiles (double-buffered input +
    # output + accumulator + slack), capped below v7x's 64 MiB physical VMEM.
    nc_footprint = _round_up(tile_nc, sublane)
    block_bytes = nc_footprint * hw_footprint * itemsize
    acc_bytes = 0 if single_pass else nc_footprint * _LANE * 4
    out_bytes = nc_footprint * _LANE * itemsize
    vmem_needed = 2 * block_bytes + 2 * out_bytes + acc_bytes + (1 << 20)
    vmem_limit = int(min(max(vmem_needed, 16 << 20), 48 << 20))

    cost = pl.CostEstimate(
        flops=nc * hw,
        transcendentals=0,
        bytes_accessed=nc * hw * itemsize + nc * itemsize,
    )

    if single_pass:
        kernel = functools.partial(_gap_single_kernel, hw_total=hw)
        out = pl.pallas_call(
            kernel,
            out_shape=jax.ShapeDtypeStruct((nc, 1), dtype),
            grid=(nc_tiles,),
            in_specs=[pl.BlockSpec((tile_nc, block_hw), lambda i: (i, 0))],
            out_specs=pl.BlockSpec((tile_nc, 1), lambda i: (i, 0)),
            compiler_params=pltpu.CompilerParams(
                dimension_semantics=("parallel",),
                vmem_limit_bytes=vmem_limit),
            cost_estimate=cost,
        )(x2)
    else:
        kernel = functools.partial(
            _gap_reduce_kernel, hw_total=hw, tile_hw=block_hw,
            need_mask=need_mask)
        out = pl.pallas_call(
            kernel,
            out_shape=jax.ShapeDtypeStruct((nc, 1), dtype),
            grid=(nc_tiles, hw_tiles),
            in_specs=[pl.BlockSpec((tile_nc, block_hw), lambda i, k: (i, k))],
            out_specs=pl.BlockSpec((tile_nc, 1), lambda i, k: (i, 0)),
            scratch_shapes=[pltpu.VMEM((tile_nc, _LANE), jnp.float32)],
            compiler_params=pltpu.CompilerParams(
                dimension_semantics=("parallel", "arbitrary"),
                vmem_limit_bytes=vmem_limit),
            cost_estimate=cost,
        )(x2)

    return out.reshape(n, c, 1, 1)


def _ref(x):
    n, c = x.shape[:2]
    return jnp.mean(x.reshape(n, c, -1), axis=2).reshape(n, c, 1, 1)


if __name__ == "__main__":
    key = jax.random.PRNGKey(0)

    # Primary (spec-sized) test: batch=2, channels=4, spatial=16x16.
    # Single-pass path (hw=256 fits one tile).
    x = jax.random.normal(key, (2, 4, 16, 16), dtype=jnp.float32)
    y = global_avg_pool_2d(x)
    jax.block_until_ready(y)
    assert y.shape == (2, 4, 1, 1)
    assert jnp.allclose(y, _ref(x), atol=1e-5, rtol=1e-5)

    # 7x7 spatial (like the backbone's final stage) with non-multiple-of-8 NC:
    # exercises the full-dim (unpadded) single-pass block.
    x2 = jax.random.normal(jax.random.PRNGKey(1), (2, 5, 7, 7), dtype=jnp.float32)
    y2 = global_avg_pool_2d(x2)
    jax.block_until_ready(y2)
    assert jnp.allclose(y2, _ref(x2), atol=1e-5, rtol=1e-5)

    # Force the multi-tile reduction path (accumulator + last-step remainder
    # mask) by shrinking the HW tile cap: hw=320 -> 3 tiles of 128 (last masked).
    x3 = jax.random.normal(jax.random.PRNGKey(2), (2, 5, 16, 20), dtype=jnp.float32)
    y3 = global_avg_pool_2d(x3, max_tile_hw=128)
    jax.block_until_ready(y3)
    assert jnp.allclose(y3, _ref(x3), atol=1e-5, rtol=1e-5)

    # Same input with a 2-lane-tile block: exercises the unrolled lane fold.
    y4 = global_avg_pool_2d(x3, max_tile_hw=256)
    jax.block_until_ready(y4)
    assert jnp.allclose(y4, _ref(x3), atol=1e-5, rtol=1e-5)

    print("KERNEL_OK")
</pallas_src>

<mosaic_0001>
module attributes {stable_mosaic.version = 11 : i64} {
  func.func @_gap_single_kernel(%arg0: i32, %arg1: memref<8x256xf32, #tpu.memory_space<vmem>>, %arg2: memref<8x1xf32, #tpu.memory_space<vmem>>) attributes {dimension_semantics = [#tpu.dimension_semantics<parallel>], iteration_bounds = array<i64: 1>, scalar_prefetch = 0 : i64, scratch_operands = 0 : i64, tpu.core_type = #tpu.core_type<tc>, window_params = [{transform_indices = @transform_0, window_bounds = array<i64: 8, 256>}, {transform_indices = @transform_1, window_bounds = array<i64: 8, 1>}]} {
    %c0 = arith.constant 0 : index
    %c0_0 = arith.constant 0 : index
    %0 = vector.load %arg1[%c0, %c0_0] : memref<8x256xf32, #tpu.memory_space<vmem>>, vector<8x256xf32>
    %cst = arith.constant dense<0.000000e+00> : vector<8xf32>
    %1 = vector.multi_reduction <add>, %0, %cst [1] : vector<8x256xf32> to vector<8xf32>
    %2 = vector.shape_cast %1 : vector<8xf32> to vector<8x1xf32>
    %cst_1 = arith.constant 3.906250e-03 : f32
    %3 = vector.broadcast %cst_1 : f32 to vector<8x1xf32>
    %4 = arith.mulf %2, %3 : vector<8x1xf32>
    %c0_2 = arith.constant 0 : index
    %c0_3 = arith.constant 0 : index
    %5 = vector.load %arg2[%c0_2, %c0_3] : memref<8x1xf32, #tpu.memory_space<vmem>>, vector<8x1xf32>
    tpu.vector_store %arg2[%c0_2, %c0_3], %4 {strides = array<i32>} : memref<8x1xf32, #tpu.memory_space<vmem>>, vector<8x1xf32>,
    return
  }
  func.func @transform_0(%arg0: i32) -> (i32, i32) {
    %c0_i32 = arith.constant 0 : i32
    %c0_i32_0 = arith.constant 0 : i32
    return %arg0, %c0_i32 : i32, i32
  }
  func.func @transform_1(%arg0: i32) -> (i32, i32) {
    %c0_i32 = arith.constant 0 : i32
    %c0_i32_0 = arith.constant 0 : i32
    return %arg0, %c0_i32 : i32, i32
  }
}

</mosaic_0001>

<llo_original>
// kernel: tpu_custom_call.1
$region0: #{tpu_custom_call.1}
  #allocation0 [shape = 'u32[]', space=smem, size = 0x4, offset = 0x4, fixed_abs, tag = 'smem constant byte address 0x4 - core index']
  #allocation1 [shape = 'u32[144,128]{1,0:T(1,128)}', space=vmem, size = 0x12000, scoped, tag = 'internal scratch']
  %s0 = inlined_call_operand.hbm [shape: f32[8,256], index: 0, kind: input, shape index: {}]
  %s1 = inlined_call_operand.vmem [shape: f32[8,1], index: 1, kind: output, shape index: {}]
  %s2 = sld [smem:[#allocation0]]
  $region18: #{tpu_custom_call.1} parent=0
    _
  %s4 = ssub.s32 1, %s2
  %s5 = scalar_select 0, %s4, %s2
  $region1: #{tpu_custom_call.1} parent=0
    #allocation2 [shape = 'u8[8192]{0}', space=vmem, size = 0x2000, scoped, tag = 'input window, operand 0, single buffered']
    #allocation3 [shape = 's32[1]{0}', space=sflag, size = 0x4, scoped, tag = 'scoped memory for tpu_custom_call.1']
    %6 = vsyncpa [#allocation3], 0
    // Predicated region
    $region2: #{tpu_custom_call.1} parent=1 // pred_check
      _
    $region3: #{tpu_custom_call.1} parent=1 // pred_check_branch
      %8 = sbr.rel (0) target = $region5
    $region4: #{tpu_custom_call.1} parent=1 // pred_region
      %s10 = ssub.s32 256, 256
      %11 = vsyncadd [#allocation3], %s10
      %s13 = sshll.u32 [#allocation2], 4
      %s14 = int_to_ptr.vmem [resolvable:$true] %s13
      %16 = dma.hbm_to_vmem [thread:$0]  %s0, 256, %s14, [#allocation3]
    $region5: #{tpu_custom_call.1} parent=1 // pred_fallthru
      _
    // Predicated region
    $region6: #{tpu_custom_call.1} parent=1 // pred_check
      _
    $region7: #{tpu_custom_call.1} parent=1 // pred_check_branch
      %18 = sbr.rel (0) target = $region9
    $region8: #{tpu_custom_call.1} parent=1 // pred_region
      %19 = dma.done [#allocation3], 256
    $region9: #{tpu_custom_call.1} parent=1 // pred_fallthru
      _
    %v20 = vld [vmem:[#allocation2] sm:$0xff]
    %v21 = vld [vmem:[#allocation2 + $0x8] sm:$0xff]
    %v22 = vadd.f32 %v20, %v21
    %23 = vadd.xlane.f32.xlu0 %v22
    %v24 = vpop.xlane.xlu0 %23
    %v25 = vmul.f32 %v24, 0.00390625
    %vm26 = vcmask 7168
    %27 = vst.msk [vmem:[%s1] sm:$0xff] %vm26, %v25
    // Predicated region
    $region10: #{tpu_custom_call.1} parent=1 // pred_check
      _
    $region11: #{tpu_custom_call.1} parent=1 // pred_check_branch
      %29 = sbr.rel (0) target = $region13
    $region12: #{tpu_custom_call.1} parent=1 // pred_region
      _
    $region13: #{tpu_custom_call.1} parent=1 // pred_fallthru
      _
    // Predicated region
    $region14: #{tpu_custom_call.1} parent=1 // pred_check
      _
    $region15: #{tpu_custom_call.1} parent=1 // pred_check_branch
      %31 = sbr.rel (0) target = $region17
    $region16: #{tpu_custom_call.1} parent=1 // pred_region
      _
    $region17: #{tpu_custom_call.1} parent=1 // pred_fallthru
      _
    %32 = vsyncpa [#allocation3], 1

</llo_original>
